<compile_context>
chip_gen: v5e
topology: v5e:2x2
jax: 0.10.0
libtpu: 0.0.40
codegen_flags: <defaults>
</compile_context>

<pallas_src>
import functools

import jax
import jax.numpy as jnp
import numpy as np
from jax import lax
from jax.experimental import pallas as pl
from jax.experimental.pallas import tpu as pltpu

LN_EPS = 1e-5      # PyTorch nn.LayerNorm default
_LANES = 128
_MAX_TILE = 2048   # packed super-rows per grid step (VMEM-safe on all gens)


def _round_up(x, m):
    return ((x + m - 1) // m) * m


def _cdiv(a, b):
    return (a + b - 1) // b


def _impute_ts_encoder_kernel(x_ref, w1_ref, b1_ref, g_ref, beta_ref,
                              s_ref, w2_ref, b2_ref, o_ref):
    """Fused Linear -> LayerNorm -> ReLU -> Linear on one lane-packed tile.

    `pack` logical rows live side by side on the 128-lane axis; weights are
    block-diagonal and bias/affine vectors are lane-tiled, so all loads,
    matmuls and stores use the full lane width.
    """
    x = x_ref[...].astype(jnp.float32)                     # [tile, pack*var_dim]

    # Linear 1 (block-diagonal W1) + bias.
    h = jnp.dot(x, w1_ref[...], preferred_element_type=jnp.float32)
    h = h + b1_ref[...]

    # LayerNorm per E-lane segment.  Segment mean / mean-of-squares via a
    # matmul against a block-diagonal (1/E) averaging matrix: the reduction
    # rides the MXU (free slot here) instead of XLU cross-lane reduces, and
    # both statistics come from a single pass over h.
    mu = jnp.dot(h, s_ref[...], preferred_element_type=jnp.float32)
    ms = jnp.dot(h * h, s_ref[...], preferred_element_type=jnp.float32)
    var = jnp.maximum(ms - mu * mu, 0.0)
    h = (h - mu) * lax.rsqrt(var + LN_EPS)
    h = h * g_ref[...] + beta_ref[...]

    # ReLU
    h = jnp.maximum(h, 0.0)

    # Linear 2 (block-diagonal W2) + bias.
    y = jnp.dot(h, w2_ref[...], preferred_element_type=jnp.float32)
    y = y + b2_ref[...]

    o_ref[...] = y.astype(o_ref.dtype)


def _auto_tile_rows(m_pack):
    """Choose a packed-row tile.

    - tiny problems: one full-array block (per-step overhead would dominate),
    - otherwise: >=2 (prefer >=4) grid steps so both v7x TensorCores get work
      on the "parallel" axis, with the tile capped at _MAX_TILE packed rows so
      double-buffered in+out VMEM stays ~2.3 MiB (safe on v5e/v6e/v7x).
    """
    if m_pack <= 256:
        return max(m_pack, 1)
    steps = max(2, _cdiv(m_pack, _MAX_TILE))
    if steps < 4 and m_pack >= 1024:
        steps = 4
    return _round_up(_cdiv(m_pack, steps), 8)


@functools.partial(jax.jit, static_argnames=("tile_rows",))
def impute_ts_encoder_forward(invar_emb, query_ts_data, query_ts_tt, params,
                              tile_rows=None):
    """Pallas implementation of ImputeTSEncoder.forward.

    invar_emb and query_ts_tt are accepted (to match the PyTorch signature)
    but unused, exactly as in the reference module.
    """
    del invar_emb, query_ts_tt  # unused by the reference forward

    w1, b1, gamma, beta, w2, b2 = (params["w1"], params["b1"], params["gamma"],
                                   params["beta"], params["w2"], params["b2"])
    B, T, var_dim = query_ts_data.shape
    E = w1.shape[1]
    M = B * T

    # Lane packing factor (4 for E=32); fall back to 1 if E doesn't divide 128.
    pack = _LANES // E if (_LANES % E == 0) else 1
    in_w, out_w = pack * var_dim, pack * E

    # Block-diagonal weights, averaging matrix and lane-tiled vectors.
    # (Tiny; in a real model these would be prepared once, not per call.)
    f32 = jnp.float32
    eye = jnp.eye(pack, dtype=f32)
    w1_bd = jnp.kron(eye, w1.astype(f32))                       # [in_w,  out_w]
    w2_bd = jnp.kron(eye, w2.astype(f32))                       # [out_w, out_w]
    avg = jnp.kron(eye, jnp.full((E, E), 1.0 / E, f32))         # [out_w, out_w]
    b1_t = jnp.tile(b1.reshape(1, E).astype(f32), (1, pack))    # [1, out_w]
    g_t = jnp.tile(gamma.reshape(1, E).astype(f32), (1, pack))
    beta_t = jnp.tile(beta.reshape(1, E).astype(f32), (1, pack))
    b2_t = jnp.tile(b2.reshape(1, E).astype(f32), (1, pack))

    # Pack rows: (M, var_dim) -> (m_pack, pack*var_dim).  Only a cheap
    # input-side pad up to a multiple of `pack` is needed; the grid itself is
    # ragged (cdiv), so no output pad / slice round trip when M % pack == 0.
    m_pack = _cdiv(M, pack)
    m_rows_padded = m_pack * pack
    x2d = query_ts_data.reshape(M, var_dim)
    if m_rows_padded != M:
        x2d = jnp.pad(x2d, ((0, m_rows_padded - M), (0, 0)))
    xp = x2d.reshape(m_pack, in_w)

    if tile_rows is None:
        tile_rows = _auto_tile_rows(m_pack)
    tile_rows = int(tile_rows)

    grid = (_cdiv(m_pack, tile_rows),)   # ragged last block handled by Pallas

    out_p = pl.pallas_call(
        _impute_ts_encoder_kernel,
        out_shape=jax.ShapeDtypeStruct((m_pack, out_w), query_ts_data.dtype),
        grid_spec=pltpu.PrefetchScalarGridSpec(
            num_scalar_prefetch=0,
            grid=grid,
            in_specs=[
                pl.BlockSpec((tile_rows, in_w), lambda i: (i, 0)),  # x (packed)
                pl.BlockSpec((in_w, out_w), lambda i: (0, 0)),      # W1 blockdiag
                pl.BlockSpec((1, out_w), lambda i: (0, 0)),         # b1 tiled
                pl.BlockSpec((1, out_w), lambda i: (0, 0)),         # gamma tiled
                pl.BlockSpec((1, out_w), lambda i: (0, 0)),         # beta tiled
                pl.BlockSpec((out_w, out_w), lambda i: (0, 0)),     # avg matrix
                pl.BlockSpec((out_w, out_w), lambda i: (0, 0)),     # W2 blockdiag
                pl.BlockSpec((1, out_w), lambda i: (0, 0)),         # b2 tiled
            ],
            out_specs=pl.BlockSpec((tile_rows, out_w), lambda i: (i, 0)),
        ),
        compiler_params=pltpu.CompilerParams(
            dimension_semantics=("parallel",)),
    )(xp, w1_bd, b1_t, g_t, beta_t, avg, w2_bd, b2_t)

    # Unpack lanes back to rows.  The reshape is free (identical row-major
    # layout); the slice only exists when B*T is not a multiple of `pack`.
    out2d = out_p.reshape(m_rows_padded, E)
    if m_rows_padded != M:
        out2d = out2d[:M]
    return out2d.reshape(B, T, E)


def init_params(key, var_dim, ts_embed_dim, dtype=jnp.float32):
    """Deterministic synthetic parameters matching the module's shapes."""
    k1, k2, k3, k4 = jax.random.split(key, 4)
    bound1 = 1.0 / jnp.sqrt(var_dim)
    bound2 = 1.0 / jnp.sqrt(ts_embed_dim)
    return {
        "w1": jax.random.uniform(k1, (var_dim, ts_embed_dim), dtype,
                                 -bound1, bound1),
        "b1": jax.random.uniform(k2, (1, ts_embed_dim), dtype,
                                 -bound1, bound1),
        "gamma": jnp.ones((1, ts_embed_dim), dtype),
        "beta": jnp.zeros((1, ts_embed_dim), dtype),
        "w2": jax.random.uniform(k3, (ts_embed_dim, ts_embed_dim), dtype,
                                 -bound2, bound2),
        "b2": jax.random.uniform(k4, (1, ts_embed_dim), dtype,
                                 -bound2, bound2),
    }


def _reference_forward(query_ts_data, params):
    """Independent float64 NumPy reference for correctness checking."""
    x = np.asarray(query_ts_data, np.float64)
    w1 = np.asarray(params["w1"], np.float64)
    b1 = np.asarray(params["b1"], np.float64).reshape(1, -1)
    g = np.asarray(params["gamma"], np.float64).reshape(1, -1)
    be = np.asarray(params["beta"], np.float64).reshape(1, -1)
    w2 = np.asarray(params["w2"], np.float64)
    b2 = np.asarray(params["b2"], np.float64).reshape(1, -1)
    h = x @ w1 + b1
    mu = h.mean(-1, keepdims=True)
    var = ((h - mu) ** 2).mean(-1, keepdims=True)
    h = (h - mu) / np.sqrt(var + LN_EPS)
    h = h * g + be
    h = np.maximum(h, 0.0)
    return h @ w2 + b2


if __name__ == "__main__":
    # Small shapes consistent with the forward: batch=2, seq=8, var_dim=4,
    # ts_embed_dim=32.
    B, T, VAR_DIM, EMBED = 2, 8, 4, 32

    key = jax.random.PRNGKey(0)
    k_params, k_data, k_invar, k_tt, k_data2 = jax.random.split(key, 5)

    params = init_params(k_params, VAR_DIM, EMBED)
    query_ts_data = jax.random.normal(k_data, (B, T, VAR_DIM), jnp.float32)
    invar_emb = jax.random.normal(k_invar, (B, EMBED), jnp.float32)  # unused
    query_ts_tt = jax.random.normal(k_tt, (B, T), jnp.float32)       # unused

    # Case 1: tiny demo shape -> single full-array block, lane-packed (M=16
    # rows -> 4 packed super-rows of 128 lanes).
    out = impute_ts_encoder_forward(invar_emb, query_ts_data, query_ts_tt,
                                    params)
    out = jax.block_until_ready(out)
    ref = _reference_forward(query_ts_data, params)
    assert out.shape == (B, T, EMBED), out.shape
    err = float(np.max(np.abs(np.asarray(out, np.float64) - ref)))
    assert np.allclose(np.asarray(out, np.float64), ref,
                       atol=5e-4, rtol=5e-4), err

    # Case 2: B*T (=201) neither a multiple of the 4-row lane pack nor of the
    # tile -> exercises the input pad, ragged (cdiv) grid with a partial last
    # block, multi-step pipeline, and the output un-pad slice.
    B2, T2 = 3, 67
    data2 = jax.random.normal(k_data2, (B2, T2, VAR_DIM), jnp.float32)
    out2 = impute_ts_encoder_forward(
        jnp.zeros((B2, EMBED), jnp.float32), data2,
        jnp.zeros((B2, T2), jnp.float32), params, tile_rows=16)
    out2 = jax.block_until_ready(out2)
    ref2 = _reference_forward(data2, params)
    assert out2.shape == (B2, T2, EMBED), out2.shape
    err2 = float(np.max(np.abs(np.asarray(out2, np.float64) - ref2)))
    assert np.allclose(np.asarray(out2, np.float64), ref2,
                       atol=5e-4, rtol=5e-4), err2

    print("KERNEL_OK")
</pallas_src>

<mosaic_0001>
module attributes {stable_mosaic.version = 11 : i64} {
  func.func @_impute_ts_encoder_kernel(%arg0: i32, %arg1: memref<4x16xf32, #tpu.memory_space<vmem>>, %arg2: memref<16x128xf32, #tpu.memory_space<vmem>>, %arg3: memref<1x128xf32, #tpu.memory_space<vmem>>, %arg4: memref<1x128xf32, #tpu.memory_space<vmem>>, %arg5: memref<1x128xf32, #tpu.memory_space<vmem>>, %arg6: memref<128x128xf32, #tpu.memory_space<vmem>>, %arg7: memref<128x128xf32, #tpu.memory_space<vmem>>, %arg8: memref<1x128xf32, #tpu.memory_space<vmem>>, %arg9: memref<4x128xf32, #tpu.memory_space<vmem>>) attributes {dimension_semantics = [#tpu.dimension_semantics<parallel>], iteration_bounds = array<i64: 1>, scalar_prefetch = 0 : i64, scratch_operands = 0 : i64, tpu.core_type = #tpu.core_type<tc>, window_params = [{transform_indices = @transform_0, window_bounds = array<i64: 4, 16>}, {pipeline_mode = #tpu.pipeline_mode<synchronous>, transform_indices = @transform_1, window_bounds = array<i64: 16, 128>}, {pipeline_mode = #tpu.pipeline_mode<synchronous>, transform_indices = @transform_2, window_bounds = array<i64: 1, 128>}, {pipeline_mode = #tpu.pipeline_mode<synchronous>, transform_indices = @transform_3, window_bounds = array<i64: 1, 128>}, {pipeline_mode = #tpu.pipeline_mode<synchronous>, transform_indices = @transform_4, window_bounds = array<i64: 1, 128>}, {pipeline_mode = #tpu.pipeline_mode<synchronous>, transform_indices = @transform_5, window_bounds = array<i64: 128, 128>}, {pipeline_mode = #tpu.pipeline_mode<synchronous>, transform_indices = @transform_6, window_bounds = array<i64: 128, 128>}, {pipeline_mode = #tpu.pipeline_mode<synchronous>, transform_indices = @transform_7, window_bounds = array<i64: 1, 128>}, {transform_indices = @transform_8, window_bounds = array<i64: 4, 128>}]} {
    %c0 = arith.constant 0 : index
    %c0_0 = arith.constant 0 : index
    %0 = vector.load %arg1[%c0, %c0_0] : memref<4x16xf32, #tpu.memory_space<vmem>>, vector<4x16xf32>
    %c0_1 = arith.constant 0 : index
    %c0_2 = arith.constant 0 : index
    %1 = vector.load %arg2[%c0_1, %c0_2] : memref<16x128xf32, #tpu.memory_space<vmem>>, vector<16x128xf32>
    %cst = arith.constant dense<0.000000e+00> : vector<4x128xf32>
    %2 = tpu.matmul %0, %1, %cst {dimension_numbers = #tpu.dot_dimension_numbers<[1], [0], [0], [1], [0, 0, 1, 1], [], []>} : vector<4x16xf32>, vector<16x128xf32>, vector<4x128xf32> -> vector<4x128xf32>
    %c0_3 = arith.constant 0 : index
    %c0_4 = arith.constant 0 : index
    %3 = vector.load %arg3[%c0_3, %c0_4] : memref<1x128xf32, #tpu.memory_space<vmem>>, vector<1x128xf32>
    %4 = vector.broadcast %3 : vector<1x128xf32> to vector<4x128xf32>
    %5 = arith.addf %2, %4 : vector<4x128xf32>
    %c0_5 = arith.constant 0 : index
    %c0_6 = arith.constant 0 : index
    %6 = vector.load %arg6[%c0_5, %c0_6] : memref<128x128xf32, #tpu.memory_space<vmem>>, vector<128x128xf32>
    %cst_7 = arith.constant dense<0.000000e+00> : vector<4x128xf32>
    %7 = tpu.matmul %5, %6, %cst_7 {dimension_numbers = #tpu.dot_dimension_numbers<[1], [0], [0], [1], [0, 0, 1, 1], [], []>} : vector<4x128xf32>, vector<128x128xf32>, vector<4x128xf32> -> vector<4x128xf32>
    %8 = arith.mulf %5, %5 : vector<4x128xf32>
    %c0_8 = arith.constant 0 : index
    %c0_9 = arith.constant 0 : index
    %9 = vector.load %arg6[%c0_8, %c0_9] : memref<128x128xf32, #tpu.memory_space<vmem>>, vector<128x128xf32>
    %cst_10 = arith.constant dense<0.000000e+00> : vector<4x128xf32>
    %10 = tpu.matmul %8, %9, %cst_10 {dimension_numbers = #tpu.dot_dimension_numbers<[1], [0], [0], [1], [0, 0, 1, 1], [], []>} : vector<4x128xf32>, vector<128x128xf32>, vector<4x128xf32> -> vector<4x128xf32>
    %11 = arith.mulf %7, %7 : vector<4x128xf32>
    %12 = arith.subf %10, %11 : vector<4x128xf32>
    %cst_11 = arith.constant 0.000000e+00 : f32
    %13 = vector.broadcast %cst_11 : f32 to vector<4x128xf32>
    %14 = arith.maximumf %12, %13 : vector<4x128xf32>
    %15 = arith.subf %5, %7 : vector<4x128xf32>
    %cst_12 = arith.constant 9.99999974E-6 : f32
    %16 = vector.broadcast %cst_12 : f32 to vector<4x128xf32>
    %17 = arith.addf %14, %16 : vector<4x128xf32>
    %18 = math.rsqrt %17 : vector<4x128xf32>
    %19 = arith.mulf %15, %18 : vector<4x128xf32>
    %c0_13 = arith.constant 0 : index
    %c0_14 = arith.constant 0 : index
    %20 = vector.load %arg4[%c0_13, %c0_14] : memref<1x128xf32, #tpu.memory_space<vmem>>, vector<1x128xf32>
    %21 = vector.broadcast %20 : vector<1x128xf32> to vector<4x128xf32>
    %22 = arith.mulf %19, %21 : vector<4x128xf32>
    %c0_15 = arith.constant 0 : index
    %c0_16 = arith.constant 0 : index
    %23 = vector.load %arg5[%c0_15, %c0_16] : memref<1x128xf32, #tpu.memory_space<vmem>>, vector<1x128xf32>
    %24 = vector.broadcast %23 : vector<1x128xf32> to vector<4x128xf32>
    %25 = arith.addf %22, %24 : vector<4x128xf32>
    %cst_17 = arith.constant 0.000000e+00 : f32
    %26 = vector.broadcast %cst_17 : f32 to vector<4x128xf32>
    %27 = arith.maximumf %25, %26 : vector<4x128xf32>
    %c0_18 = arith.constant 0 : index
    %c0_19 = arith.constant 0 : index
    %28 = vector.load %arg7[%c0_18, %c0_19] : memref<128x128xf32, #tpu.memory_space<vmem>>, vector<128x128xf32>
    %cst_20 = arith.constant dense<0.000000e+00> : vector<4x128xf32>
    %29 = tpu.matmul %27, %28, %cst_20 {dimension_numbers = #tpu.dot_dimension_numbers<[1], [0], [0], [1], [0, 0, 1, 1], [], []>} : vector<4x128xf32>, vector<128x128xf32>, vector<4x128xf32> -> vector<4x128xf32>
    %c0_21 = arith.constant 0 : index
    %c0_22 = arith.constant 0 : index
    %30 = vector.load %arg8[%c0_21, %c0_22] : memref<1x128xf32, #tpu.memory_space<vmem>>, vector<1x128xf32>
    %31 = vector.broadcast %30 : vector<1x128xf32> to vector<4x128xf32>
    %32 = arith.addf %29, %31 : vector<4x128xf32>
    %c0_23 = arith.constant 0 : index
    %c0_24 = arith.constant 0 : index
    %33 = vector.load %arg9[%c0_23, %c0_24] : memref<4x128xf32, #tpu.memory_space<vmem>>, vector<4x128xf32>
    tpu.vector_store %arg9[%c0_23, %c0_24], %32 {strides = array<i32>} : memref<4x128xf32, #tpu.memory_space<vmem>>, vector<4x128xf32>,
    return
  }
  func.func @transform_0(%arg0: i32) -> (i32, i32) {
    %c0_i32 = arith.constant 0 : i32
    %c0_i32_0 = arith.constant 0 : i32
    return %arg0, %c0_i32 : i32, i32
  }
  func.func @transform_1(%arg0: i32) -> (i32, i32) {
    %c0_i32 = arith.constant 0 : i32
    %c0_i32_0 = arith.constant 0 : i32
    %c0_i32_1 = arith.constant 0 : i32
    return %c0_i32, %c0_i32_0 : i32, i32
  }
  func.func @transform_2(%arg0: i32) -> (i32, i32) {
    %c0_i32 = arith.constant 0 : i32
    %c0_i32_0 = arith.constant 0 : i32
    %c0_i32_1 = arith.constant 0 : i32
    return %c0_i32, %c0_i32_0 : i32, i32
  }
  func.func @transform_3(%arg0: i32) -> (i32, i32) {
    %c0_i32 = arith.constant 0 : i32
    %c0_i32_0 = arith.constant 0 : i32
    %c0_i32_1 = arith.constant 0 : i32
    return %c0_i32, %c0_i32_0 : i32, i32
  }
  func.func @transform_4(%arg0: i32) -> (i32, i32) {
    %c0_i32 = arith.constant 0 : i32
    %c0_i32_0 = arith.constant 0 : i32
    %c0_i32_1 = arith.constant 0 : i32
    return %c0_i32, %c0_i32_0 : i32, i32
  }
  func.func @transform_5(%arg0: i32) -> (i32, i32) {
    %c0_i32 = arith.constant 0 : i32
    %c0_i32_0 = arith.constant 0 : i32
    %c0_i32_1 = arith.constant 0 : i32
    return %c0_i32, %c0_i32_0 : i32, i32
  }
  func.func @transform_6(%arg0: i32) -> (i32, i32) {
    %c0_i32 = arith.constant 0 : i32
    %c0_i32_0 = arith.constant 0 : i32
    %c0_i32_1 = arith.constant 0 : i32
    return %c0_i32, %c0_i32_0 : i32, i32
  }
  func.func @transform_7(%arg0: i32) -> (i32, i32) {
    %c0_i32 = arith.constant 0 : i32
    %c0_i32_0 = arith.constant 0 : i32
    %c0_i32_1 = arith.constant 0 : i32
    return %c0_i32, %c0_i32_0 : i32, i32
  }
  func.func @transform_8(%arg0: i32) -> (i32, i32) {
    %c0_i32 = arith.constant 0 : i32
    %c0_i32_0 = arith.constant 0 : i32
    return %arg0, %c0_i32 : i32, i32
  }
}

</mosaic_0001>

<llo_original>
// kernel: impute_ts_encoder_forward.1
$region0: #{impute_ts_encoder_forward.1}
  #allocation0 [shape = 'u32[]', space=smem, size = 0x4, offset = 0x4, fixed_abs, tag = 'smem constant byte address 0x4 - core index']
  #allocation1 [shape = 'u32[72,128]{1,0:T(1,128)}', space=vmem, size = 0x9000, scoped, tag = 'internal scratch']
  %s0 = inlined_call_operand.vmem [shape: f32[4,16], index: 0, kind: input, shape index: {}]
  %s1 = inlined_call_operand.vmem [shape: f32[16,128], index: 1, kind: input, shape index: {}]
  %s2 = inlined_call_operand.vmem [shape: f32[1,128], index: 2, kind: input, shape index: {}]
  %s3 = inlined_call_operand.vmem [shape: f32[1,128], index: 3, kind: input, shape index: {}]
  %s4 = inlined_call_operand.vmem [shape: f32[1,128], index: 4, kind: input, shape index: {}]
  %s5 = inlined_call_operand.vmem [shape: f32[128,128], index: 5, kind: input, shape index: {}]
  %s6 = inlined_call_operand.vmem [shape: f32[128,128], index: 6, kind: input, shape index: {}]
  %s7 = inlined_call_operand.vmem [shape: f32[1,128], index: 7, kind: input, shape index: {}]
  %s8 = inlined_call_operand.vmem [shape: f32[4,128], index: 8, kind: output, shape index: {}]
  %s9 = sld [smem:[#allocation0]]
  $region42: #{impute_ts_encoder_forward.1} parent=0
    _
  %s11 = ssub.s32 1, %s9
  %s12 = scalar_select 0, %s11, %s9
  // Predicated region
  $region2: #{impute_ts_encoder_forward.1} parent=0 // pred_check
    _
  $region3: #{impute_ts_encoder_forward.1} parent=0 // pred_check_branch
    %14 = sbr.rel (0) target = $region5
  $region4: #{impute_ts_encoder_forward.1} parent=0 // pred_region
    _
  $region5: #{impute_ts_encoder_forward.1} parent=0 // pred_fallthru
    _
  // Predicated region
  $region6: #{impute_ts_encoder_forward.1} parent=0 // pred_check
    _
  $region7: #{impute_ts_encoder_forward.1} parent=0 // pred_check_branch
    %16 = sbr.rel (0) target = $region9
  $region8: #{impute_ts_encoder_forward.1} parent=0 // pred_region
    _
  $region9: #{impute_ts_encoder_forward.1} parent=0 // pred_fallthru
    _
  // Predicated region
  $region10: #{impute_ts_encoder_forward.1} parent=0 // pred_check
    _
  $region11: #{impute_ts_encoder_forward.1} parent=0 // pred_check_branch
    %18 = sbr.rel (0) target = $region13
  $region12: #{impute_ts_encoder_forward.1} parent=0 // pred_region
    _
  $region13: #{impute_ts_encoder_forward.1} parent=0 // pred_fallthru
    _
  // Predicated region
  $region14: #{impute_ts_encoder_forward.1} parent=0 // pred_check
    _
  $region15: #{impute_ts_encoder_forward.1} parent=0 // pred_check_branch
    %20 = sbr.rel (0) target = $region17
  $region16: #{impute_ts_encoder_forward.1} parent=0 // pred_region
    _
  $region17: #{impute_ts_encoder_forward.1} parent=0 // pred_fallthru
    _
  // Predicated region
  $region18: #{impute_ts_encoder_forward.1} parent=0 // pred_check
    _
  $region19: #{impute_ts_encoder_forward.1} parent=0 // pred_check_branch
    %22 = sbr.rel (0) target = $region21
  $region20: #{impute_ts_encoder_forward.1} parent=0 // pred_region
    _
  $region21: #{impute_ts_encoder_forward.1} parent=0 // pred_fallthru
    _
  // Predicated region
  $region22: #{impute_ts_encoder_forward.1} parent=0 // pred_check
    _
  $region23: #{impute_ts_encoder_forward.1} parent=0 // pred_check_branch
    %24 = sbr.rel (0) target = $region25
  $region24: #{impute_ts_encoder_forward.1} parent=0 // pred_region
    _
  $region25: #{impute_ts_encoder_forward.1} parent=0 // pred_fallthru
    _
  // Predicated region
  $region26: #{impute_ts_encoder_forward.1} parent=0 // pred_check
    _
  $region27: #{impute_ts_encoder_forward.1} parent=0 // pred_check_branch
    %26 = sbr.rel (0) target = $region29
  $region28: #{impute_ts_encoder_forward.1} parent=0 // pred_region
    _
  $region29: #{impute_ts_encoder_forward.1} parent=0 // pred_fallthru
    _
  // Predicated region
  $region30: #{impute_ts_encoder_forward.1} parent=0 // pred_check
    _
  $region31: #{impute_ts_encoder_forward.1} parent=0 // pred_check_branch
    %28 = sbr.rel (0) target = $region33
  $region32: #{impute_ts_encoder_forward.1} parent=0 // pred_region
    _
  $region33: #{impute_ts_encoder_forward.1} parent=0 // pred_fallthru
    _
  %v29 = vld [vmem:[%s0] sm:$0xf]
  %v30 = vld [vmem:[%s1] sm:$0xff]
  %v31 = vld [vmem:[%s1 + $0x8] sm:$0xff]
  %v32 = vld [vmem:[%s2] sm:$0x1]
  %v34 = vperm.slane %v32, 0
  %vm36 = vcmask 130048
  %v38 = vsel %vm36, %v29, 0
  %40 = vmatpush.msra.mxu0 0.0
  %41 = vmatpush.msra.mxu0 0.0
  %42 = vmatpush.msra.mxu0 0.0
  %43 = vmatpush.msra.mxu0 0.0
  %44 = vmatpush.msra.mxu0 0.0
  %45 = vmatpush.msra.mxu0 0.0
  %46 = vmatpush.msra.mxu0 0.0
  %47 = vmatpush.msra.mxu0 0.0
  %48 = vmatpush.msra.mxu0 0.0
  %49 = vmatpush.msra.mxu0 0.0
  %50 = vmatpush.msra.mxu0 0.0
  %51 = vmatpush.msra.mxu0 0.0
  %52 = vmatpush.msra.mxu0 0.0
  %53 = vmatpush.msra.mxu0 0.0
  %54 = vmatpush.msra.mxu0 %v31
  %55 = vmatpush.msra.mxu0 %v30
  %56 = vmatmul.f32.gmra.mxu0 %v38
  %v57 = vpop.f32.mrf.mxu0
  %v58 = vadd.f32 %v34, %v57
  %59 = vdwg.mxu0
  %v60 = vld [vmem:[%s5] sm:$0xff]
  %v61 = vld [vmem:[%s5 + $0x8] sm:$0xff]
  %v62 = vld [vmem:[%s5 + $0x10] sm:$0xff]
  %v63 = vld [vmem:[%s5 + $0x18] sm:$0xff]
  %v64 = vld [vmem:[%s5 + $0x20] sm:$0xff]
  %v65 = vld [vmem:[%s5 + $0x28] sm:$0xff]
  %v66 = vld [vmem:[%s5 + $0x30] sm:$0xff]
  %v67 = vld [vmem:[%s5 + $0x38] sm:$0xff]
  %v68 = vld [vmem:[%s5 + $0x40] sm:$0xff]
  %v69 = vld [vmem:[%s5 + $0x48] sm:$0xff]
  %v70 = vld [vmem:[%s5 + $0x50] sm:$0xff]
  %v71 = vld [vmem:[%s5 + $0x58] sm:$0xff]
  %v72 = vld [vmem:[%s5 + $0x60] sm:$0xff]
  %v73 = vld [vmem:[%s5 + $0x68] sm:$0xff]
  %v74 = vld [vmem:[%s5 + $0x70] sm:$0xff]
  %v75 = vld [vmem:[%s5 + $0x78] sm:$0xff]
  %76 = vmatpush.msra.mxu0 %v75
  %77 = vmatpush.msra.mxu0 %v74
  %78 = vmatpush.msra.mxu0 %v73
  %79 = vmatpush.msra.mxu0 %v72
  %80 = vmatpush.msra.mxu0 %v71
  %81 = vmatpush.msra.mxu0 %v70
  %82 = vmatpush.msra.mxu0 %v69
  %83 = vmatpush.msra.mxu0 %v68
  %84 = vmatpush.msra.mxu0 %v67
  %85 = vmatpush.msra.mxu0 %v66
  %86 = vmatpush.msra.mxu0 %v65
  %87 = vmatpush.msra.mxu0 %v64
  %88 = vmatpush.msra.mxu0 %v63
  %89 = vmatpush.msra.mxu0 %v62
  %90 = vmatpush.msra.mxu0 %v61
  %91 = vmatpush.msra.mxu0 %v60
  %92 = vmatmul.f32.gmra.mxu0 %v58
  %v93 = vpop.f32.mrf.mxu0
  %v94 = vadd.f32 0.0, %v93
  %95 = vdwg.mxu0
  %v96 = vmul.f32 %v58, %v58
  %97 = vmatpush.msra.mxu0 %v75
  %98 = vmatpush.msra.mxu0 %v74
  %99 = vmatpush.msra.mxu0 %v73
  %100 = vmatpush.msra.mxu0 %v72
  %101 = vmatpush.msra.mxu0 %v71
  %102 = vmatpush.msra.mxu0 %v70
  %103 = vmatpush.msra.mxu0 %v69
  %104 = vmatpush.msra.mxu0 %v68
  %105 = vmatpush.msra.mxu0 %v67
  %106 = vmatpush.msra.mxu0 %v66
  %107 = vmatpush.msra.mxu0 %v65
  %108 = vmatpush.msra.mxu0 %v64
  %109 = vmatpush.msra.mxu0 %v63
  %110 = vmatpush.msra.mxu0 %v62
  %111 = vmatpush.msra.mxu0 %v61
  %112 = vmatpush.msra.mxu0 %v60
  %113 = vmatmul.f32.gmra.mxu0 %v96
  %v114 = vpop.f32.mrf.mxu0
  %v115 = vadd.f32 0.0, %v114
  %116 = vdwg.mxu0
  %v117 = vmul.f32 %v94, %v94
  %v118 = vsub.f32 %v115, %v117
  %v119 = vmax.f32 %v118, 0.0
  %v120 = vsub.f32 %v58, %v94
  %v121 = vadd.f32 %v119, 1e-05
  %v122 = vrsqrt.pop %v121
  %v123 = vmul.f32 %v122, %v121
  %v124 = vmul.f32 %v123, %v122
  %v125 = vmul.f32 0.5, %v124
  %v126 = vsub.f32 1.5, %v125
  %v127 = vmul.f32 %v122, %v126
  %vm128 = vweird.f32 %v121
  %vm129 = vweird.f32 %v122
  %vm130 = vmor %vm128, %vm129
  %v131 = vsel %vm130, %v122, %v127
  %v132 = vmul.f32 %v120, %v131
  %v133 = vld [vmem:[%s3] sm:$0x1]
  %v135 = vperm.slane %v133, 0
  %v137 = vmul.f32 %v132, %v135
  %v138 = vld [vmem:[%s4] sm:$0x1]
  %v140 = vperm.slane %v138, 0
  %v142 = vadd.f32 %v137, %v140
  %v143 = vmax.f32 %v142, 0.0
  %v144 = vld [vmem:[%s6] sm:$0xff]
  %v145 = vld [vmem:[%s6 + $0x8] sm:$0xff]
  %v146 = vld [vmem:[%s6 + $0x10] sm:$0xff]
  %v147 = vld [vmem:[%s6 + $0x18] sm:$0xff]
  %v148 = vld [vmem:[%s6 + $0x20] sm:$0xff]
  %v149 = vld [vmem:[%s6 + $0x28] sm:$0xff]
  %v150 = vld [vmem:[%s6 + $0x30] sm:$0xff]
  %v151 = vld [vmem:[%s6 + $0x38] sm:$0xff]
  %v152 = vld [vmem:[%s6 + $0x40] sm:$0xff]
  %v153 = vld [vmem:[%s6 + $0x48] sm:$0xff]
  %v154 = vld [vmem:[%s6 + $0x50] sm:$0xff]
  %v155 = vld [vmem:[%s6 + $0x58] sm:$0xff]
  %v156 = vld [vmem:[%s6 + $0x60] sm:$0xff]
  %v157 = vld [vmem:[%s6 + $0x68] sm:$0xff]
  %v158 = vld [vmem:[%s6 + $0x70] sm:$0xff]
  %v159 = vld [vmem:[%s6 + $0x78] sm:$0xff]
  %v160 = vld [vmem:[%s7] sm:$0x1]
  %v162 = vperm.slane %v160, 0
  %164 = vmatpush.msra.mxu0 %v159
  %165 = vmatpush.msra.mxu0 %v158
  %166 = vmatpush.msra.mxu0 %v157
  %167 = vmatpush.msra.mxu0 %v156
  %168 = vmatpush.msra.mxu0 %v155
  %169 = vmatpush.msra.mxu0 %v154
  %170 = vmatpush.msra.mxu0 %v153
  %171 = vmatpush.msra.mxu0 %v152
  %172 = vmatpush.msra.mxu0 %v151
  %173 = vmatpush.msra.mxu0 %v150
  %174 = vmatpush.msra.mxu0 %v149
  %175 = vmatpush.msra.mxu0 %v148
  %176 = vmatpush.msra.mxu0 %v147
  %177 = vmatpush.msra.mxu0 %v146
  %178 = vmatpush.msra.mxu0 %v145
  %179 = vmatpush.msra.mxu0 %v144
  %180 = vmatmul.f32.gmra.mxu0 %v143
  %v181 = vpop.f32.mrf.mxu0
  %v182 = vadd.f32 %v162, %v181
  %183 = vdwg.mxu0
  %184 = vst [vmem:[%s8] sm:$0xf] %v182
  // Predicated region
  $region34: #{impute_ts_encoder_forward.1} parent=0 // pred_check
    _
  $region35: #{impute_ts_encoder_forward.1} parent=0 // pred_check_branch
    %186 = sbr.rel (0) target = $region37
  $region36: #{impute_ts_encoder_forward.1} parent=0 // pred_region
    _
  $region37: #{impute_ts_encoder_forward.1} parent=0 // pred_fallthru
    _
  // Predicated region
  $region38: #{impute_ts_encoder_forward.1} parent=0 // pred_check
    _
  $region39: #{impute_ts_encoder_forward.1} parent=0 // pred_check_branch
    %188 = sbr.rel (0) target = $region41
  $region40: #{impute_ts_encoder_forward.1} parent=0 // pred_region
    _
  $region41: #{impute_ts_encoder_forward.1} parent=0 // pred_fallthru
    _

</llo_original>
